<compile_context>
chip_gen: v7x
topology: tpu7x:2x2x1
jax: 0.10.0
libtpu: 0.0.40
codegen_flags: <defaults>
</compile_context>

<pallas_src>
import functools
import math

import jax
import jax.numpy as jnp
from jax import lax
from jax.experimental import pallas as pl
from jax.experimental.pallas import tpu as pltpu

_LANE = 128            # lane (last dim) padding granularity
_SUBLANE = 8           # sublane (second-to-last dim) granularity for f32
_TILE_B_CAP = 1024     # measured: >=512-row tiles reach ~85% of HBM roofline
_DEFAULT_VMEM_CAP = 64 << 20   # conservative fallback = v7x per-TC VMEM


def _round_up(n: int, m: int) -> int:
    return ((n + m - 1) // m) * m


def _vmem_capacity_bytes() -> int:
    try:
        return int(pltpu.get_tpu_info().vmem_capacity_bytes)
    except Exception:
        return _DEFAULT_VMEM_CAP


def _pad2d(a, rows: int, cols: int):
    r, c = a.shape
    if r == rows and c == cols:
        return a
    return jnp.pad(a, ((0, rows - r), (0, cols - c)))


def _gelu(y, approximate: bool):
    if approximate:
        # tanh approximation lowers to the EUP (separate VLIW slot); not
        # bit-exact vs. PyTorch's default nn.GELU().
        return jax.nn.gelu(y, approximate=True)
    # Exact erf-based GELU, matching PyTorch's default nn.GELU(); f32 VPU math.
    return 0.5 * y * (1.0 + lax.erf(y * (1.0 / math.sqrt(2.0))))


def _choose_tile_b(b_aligned: int, max_tile_b: int):
    """Pick (tile_b, num_tiles).

    Single tile when the whole (8-aligned) batch fits; otherwise the largest
    tile <= max_tile_b that divides the 8-aligned batch (so no extra batch
    padding / wrapper HBM pass), preferring an even number of tiles so both
    v7x TensorCores get work.
    """
    if b_aligned <= max_tile_b:
        return b_aligned, 1
    top = max(_SUBLANE, (max_tile_b // _SUBLANE) * _SUBLANE)
    best = None
    for cand in range(top, max(_SUBLANE, top // 2) - 1, -_SUBLANE):
        if b_aligned % cand == 0:
            nt = b_aligned // cand
            if nt % 2 == 0:
                return cand, nt
            if best is None:
                best = (cand, nt)
    if best is not None:
        return best
    # No divisor in range: pad the batch up to a tile multiple.
    nt = -(-b_aligned // top)
    return top, nt


def _ffnn_fused_kernel(*refs, apply_act, compute_dtype, approx_gelu):
    """o = L_{k}(act(...act(L_0(x))...)) for one batch tile, fully fused.

    refs = (x_ref, w0_ref, b0_ref, ..., w_{k}_ref, b_{k}_ref, o_ref).
    The running activation stays in VMEM between layers (no HBM round-trips).
    """
    x_ref = refs[0]
    o_ref = refs[-1]
    wb = refs[1:-1]

    h = x_ref[...]
    for idx, act in enumerate(apply_act):
        w = wb[2 * idx][...]
        b = wb[2 * idx + 1][...]
        # MXU matmul (optionally bf16 operands), always f32 accumulation.
        y = jnp.dot(h.astype(compute_dtype), w.astype(compute_dtype),
                    preferred_element_type=jnp.float32)
        y = y + b.astype(jnp.float32)
        if act:
            y = _gelu(y, approx_gelu)
        h = y
    o_ref[...] = h.astype(o_ref.dtype)


def _fused_group_call(x_p, wb_flat, dims_p, apply_act, *, tile_b, num_tiles,
                      out_dtype, compute_dtype, approx_gelu, vmem_limit):
    """One fused pallas_call over a group of consecutive layers."""
    n_layers = len(apply_act)
    b_pad = x_p.shape[0]
    kernel = functools.partial(_ffnn_fused_kernel, apply_act=apply_act,
                               compute_dtype=compute_dtype,
                               approx_gelu=approx_gelu)
    out_shape = jax.ShapeDtypeStruct((b_pad, dims_p[-1]), out_dtype)

    if num_tiles == 1:
        # Single batch tile: grid-less call, every operand fully VMEM-resident,
        # no pipelining machinery / per-operand double buffering.
        vmem = pl.BlockSpec(memory_space=pltpu.MemorySpace.VMEM)
        return pl.pallas_call(
            kernel,
            out_shape=out_shape,
            in_specs=[vmem] * (1 + 2 * n_layers),
            out_specs=vmem,
            compiler_params=pltpu.CompilerParams(vmem_limit_bytes=vmem_limit),
        )(x_p, *wb_flat)

    # Batch tiled over a "parallel" grid axis (shards across v7x's 2 TCs).
    # Weights/biases: constant index_map (DMA'd once, kept resident) and
    # Buffered(1) so they are not pointlessly double-buffered.
    in_specs = [pl.BlockSpec((tile_b, dims_p[0]), lambda i: (i, 0))]
    for li in range(n_layers):
        in_specs.append(pl.BlockSpec((dims_p[li], dims_p[li + 1]),
                                     lambda i: (0, 0),
                                     pipeline_mode=pl.Buffered(1)))
        in_specs.append(pl.BlockSpec((1, dims_p[li + 1]),
                                     lambda i: (0, 0),
                                     pipeline_mode=pl.Buffered(1)))
    return pl.pallas_call(
        kernel,
        out_shape=out_shape,
        grid=(num_tiles,),
        in_specs=in_specs,
        out_specs=pl.BlockSpec((tile_b, dims_p[-1]), lambda i: (i, 0)),
        compiler_params=pltpu.CompilerParams(
            dimension_semantics=("parallel",),
            vmem_limit_bytes=vmem_limit),
    )(x_p, *wb_flat)


def ffnn_forward(x, params, *, compute_dtype=jnp.float32, out_dtype=None,
                 approx_gelu=False, lane_align=_LANE,
                 max_tile_b=None, weight_budget_bytes=None):
    """Fused FFNN forward pass.

    x: (B, layers[0]); params: list of (w_i, b_i) with w_i: (n_in, n_out)
    (transpose of PyTorch nn.Linear.weight) and b_i: (1, n_out).

    compute_dtype: matmul operand dtype (f32 = exact PyTorch numerics; bf16 is
      MXU-native on all of v5e/v6e/v7x, f32 accumulation, bias+GELU in f32).
    lane_align: feature padding granularity (128; use 256 for MXU-bound layers
      on v6e/v7x whose true dims are already >=128).
    max_tile_b / weight_budget_bytes: optional overrides of the auto-derived
      batch tile and per-group resident-weight VMEM budget.
    """
    n_layers = len(params)
    B, f_in = x.shape
    dims = [f_in] + [w.shape[1] for (w, _) in params]
    compute_dtype = jnp.dtype(compute_dtype)
    is_f32_compute = compute_dtype == jnp.dtype(jnp.float32)
    out_dtype = x.dtype if out_dtype is None else out_dtype

    dims_p = [_round_up(d, lane_align) for d in dims]
    w_itemsize = compute_dtype.itemsize

    vmem_cap = _vmem_capacity_bytes()
    if weight_budget_bytes is None:
        # Per-TensorCore budget for resident weights (v7x: 64 MiB total).
        weight_budget_bytes = int(0.55 * vmem_cap)

    def layer_bytes(li):
        return dims_p[li] * dims_p[li + 1] * w_itemsize + dims_p[li + 1] * 4

    # Greedily group consecutive layers so each group's resident weights fit
    # the budget.  Each group is one fused pallas_call; the activation only
    # touches HBM between groups (per-layer fallback in the limit).
    groups, cur, cur_b = [], [], 0
    for li in range(n_layers):
        lb = layer_bytes(li)
        if cur and cur_b + lb > weight_budget_bytes:
            groups.append(cur)
            cur, cur_b = [], 0
        cur.append(li)
        cur_b += lb
        # TODO(synk): a single layer whose padded weights alone exceed the VMEM
        # budget would need an extra N/K grid axis; not implemented here.
    groups.append(cur)

    max_group_bytes = max(sum(layer_bytes(li) for li in g) for g in groups)
    max_dim = max(dims_p)
    # Per-row VMEM cost: 2x input tile + 2x output tile (pipeline double
    # buffering) + ~2 live f32 intermediates, conservatively at max width.
    per_row = 4 * max_dim * 6
    act_budget = max(int(0.75 * vmem_cap) - max_group_bytes, _SUBLANE * per_row)
    auto_tile = max(_SUBLANE,
                    min(_TILE_B_CAP,
                        (act_budget // per_row) // _SUBLANE * _SUBLANE))
    if max_tile_b is not None:
        auto_tile = min(auto_tile, _round_up(max_tile_b, _SUBLANE))

    b_aligned = _round_up(B, _SUBLANE)
    tile_b, num_tiles = _choose_tile_b(b_aligned, auto_tile)
    b_pad = tile_b * num_tiles

    vmem_limit = int(1.25 * (max_group_bytes + tile_b * per_row))
    vmem_limit = max(32 << 20, min(vmem_limit, int(0.9 * vmem_cap)))

    # Pad & cast once (no-ops when already aligned).  Weights stored in the
    # matmul dtype (halves weight DMA on the bf16 path); bias stays f32 (added
    # after the f32 accumulation).  bf16 input cast halves input DMA.
    x_dtype = x.dtype if is_f32_compute else compute_dtype
    h = _pad2d(x, b_pad, dims_p[0]).astype(x_dtype)
    padded = []
    for i, (w, b) in enumerate(params):
        padded.append((_pad2d(w, dims_p[i], dims_p[i + 1]).astype(compute_dtype),
                       _pad2d(b, 1, dims_p[i + 1]).astype(jnp.float32)))

    inter_dtype = jnp.float32 if is_f32_compute else compute_dtype
    for gi, g in enumerate(groups):
        g_dims = [dims_p[g[0]]] + [dims_p[li + 1] for li in g]
        apply_act = tuple(li < n_layers - 1 for li in g)
        wb_flat = []
        for li in g:
            wb_flat += list(padded[li])
        g_out = out_dtype if gi == len(groups) - 1 else inter_dtype
        h = _fused_group_call(h, wb_flat, g_dims, apply_act,
                              tile_b=tile_b, num_tiles=num_tiles,
                              out_dtype=g_out, compute_dtype=compute_dtype,
                              approx_gelu=approx_gelu, vmem_limit=vmem_limit)

    if b_pad == B and dims_p[-1] == dims[-1]:
        return h                      # no wrapper-side slice / extra HBM pass
    return h[:B, :dims[-1]]


def init_ffnn_params(key, layers):
    """Deterministic init mimicking PyTorch nn.Linear (uniform +-1/sqrt(fan_in))."""
    params = []
    for n_i, n_o in zip(layers[:-1], layers[1:]):
        key, kw, kb = jax.random.split(key, 3)
        bound = 1.0 / math.sqrt(n_i)
        w = jax.random.uniform(kw, (n_i, n_o), jnp.float32, -bound, bound)
        b = jax.random.uniform(kb, (1, n_o), jnp.float32, -bound, bound)
        params.append((w, b))
    return params


def ffnn_reference(x, params):
    """Pure-JAX reference for correctness checking."""
    n_layers = len(params)
    h = x
    for idx, (w, b) in enumerate(params):
        h = h @ w + b
        if idx < n_layers - 1:
            h = _gelu(h, approximate=False)
    return h


if __name__ == "__main__":
    # FFNN(layers=[16, 32, 32, 8]): two hidden Linear+GELU, final Linear.
    layers = [16, 32, 32, 8]
    batch = 2

    key = jax.random.PRNGKey(0)
    key, kx = jax.random.split(key)
    x = jax.random.normal(kx, (batch, layers[0]), jnp.float32)
    params = init_ffnn_params(key, layers)

    ref = ffnn_reference(x, params)

    # 1) f32 path (exact numerics vs PyTorch's erf-GELU), single-tile fused call.
    fwd_f32 = jax.jit(functools.partial(ffnn_forward, compute_dtype=jnp.float32))
    out = jax.block_until_ready(fwd_f32(x, params))
    assert out.shape == (batch, layers[-1])
    assert jnp.allclose(out, ref, atol=1e-5, rtol=1e-5), "f32 mismatch vs reference"

    # 2) bf16-operand path (MXU-native on v5e/v6e/v7x), f32 accumulation.
    fwd_bf16 = jax.jit(functools.partial(ffnn_forward, compute_dtype=jnp.bfloat16))
    out_bf16 = jax.block_until_ready(fwd_bf16(x, params))
    assert jnp.allclose(out_bf16.astype(jnp.float32), ref, atol=5e-2, rtol=5e-2), \
        "bf16 mismatch vs reference"

    # 3) Larger batch with a forced small tile to exercise the gridded,
    #    weights-resident (Buffered(1)), parallel-axis path (4 even tiles).
    kx_big = jax.random.fold_in(kx, 7)
    x_big = jax.random.normal(kx_big, (512, layers[0]), jnp.float32)
    fwd_grid = jax.jit(functools.partial(ffnn_forward, compute_dtype=jnp.float32,
                                         max_tile_b=128))
    out_big = jax.block_until_ready(fwd_grid(x_big, params))
    ref_big = ffnn_reference(x_big, params)
    assert out_big.shape == (512, layers[-1])
    assert jnp.allclose(out_big, ref_big, atol=1e-5, rtol=1e-5), \
        "gridded mismatch vs reference"

    # 4) Force a tiny weight budget to exercise the per-layer-group fallback
    #    path (multiple fused pallas_calls chained through HBM).
    fwd_split = jax.jit(functools.partial(ffnn_forward, compute_dtype=jnp.float32,
                                          weight_budget_bytes=1))
    out_split = jax.block_until_ready(fwd_split(x, params))
    assert jnp.allclose(out_split, ref, atol=1e-5, rtol=1e-5), \
        "grouped mismatch vs reference"

    print("KERNEL_OK")
</pallas_src>

<mosaic_0001>
module attributes {stable_mosaic.version = 11 : i64} {
  func.func @_ffnn_fused_kernel(%arg0: memref<8x128xf32, #tpu.memory_space<vmem>>, %arg1: memref<128x128xf32, #tpu.memory_space<vmem>>, %arg2: memref<1x128xf32, #tpu.memory_space<vmem>>, %arg3: memref<128x128xf32, #tpu.memory_space<vmem>>, %arg4: memref<1x128xf32, #tpu.memory_space<vmem>>, %arg5: memref<128x128xf32, #tpu.memory_space<vmem>>, %arg6: memref<1x128xf32, #tpu.memory_space<vmem>>, %arg7: memref<8x128xf32, #tpu.memory_space<vmem>>) attributes {dimension_semantics = [], scalar_prefetch = 0 : i64, scratch_operands = 0 : i64, tpu.core_type = #tpu.core_type<tc>} {
    %c0 = arith.constant 0 : index
    %c0_0 = arith.constant 0 : index
    %0 = vector.load %arg0[%c0, %c0_0] : memref<8x128xf32, #tpu.memory_space<vmem>>, vector<8x128xf32>
    %c0_1 = arith.constant 0 : index
    %c0_2 = arith.constant 0 : index
    %1 = vector.load %arg1[%c0_1, %c0_2] : memref<128x128xf32, #tpu.memory_space<vmem>>, vector<128x128xf32>
    %c0_3 = arith.constant 0 : index
    %c0_4 = arith.constant 0 : index
    %2 = vector.load %arg2[%c0_3, %c0_4] : memref<1x128xf32, #tpu.memory_space<vmem>>, vector<1x128xf32>
    %cst = arith.constant dense<0.000000e+00> : vector<8x128xf32>
    %3 = tpu.matmul %0, %1, %cst {dimension_numbers = #tpu.dot_dimension_numbers<[1], [0], [0], [1], [0, 0, 1, 1], [], []>} : vector<8x128xf32>, vector<128x128xf32>, vector<8x128xf32> -> vector<8x128xf32>
    %4 = vector.broadcast %2 : vector<1x128xf32> to vector<8x128xf32>
    %5 = arith.addf %3, %4 : vector<8x128xf32>
    %cst_5 = arith.constant 5.000000e-01 : f32
    %6 = vector.broadcast %cst_5 : f32 to vector<8x128xf32>
    %7 = arith.mulf %6, %5 : vector<8x128xf32>
    %cst_6 = arith.constant 0.707106769 : f32
    %8 = vector.broadcast %cst_6 : f32 to vector<8x128xf32>
    %9 = arith.mulf %5, %8 : vector<8x128xf32>
    %10 = math.erf %9 : vector<8x128xf32>
    %cst_7 = arith.constant 1.000000e+00 : f32
    %11 = vector.broadcast %cst_7 : f32 to vector<8x128xf32>
    %12 = arith.addf %11, %10 : vector<8x128xf32>
    %13 = arith.mulf %7, %12 : vector<8x128xf32>
    %c0_8 = arith.constant 0 : index
    %c0_9 = arith.constant 0 : index
    %14 = vector.load %arg3[%c0_8, %c0_9] : memref<128x128xf32, #tpu.memory_space<vmem>>, vector<128x128xf32>
    %c0_10 = arith.constant 0 : index
    %c0_11 = arith.constant 0 : index
    %15 = vector.load %arg4[%c0_10, %c0_11] : memref<1x128xf32, #tpu.memory_space<vmem>>, vector<1x128xf32>
    %cst_12 = arith.constant dense<0.000000e+00> : vector<8x128xf32>
    %16 = tpu.matmul %13, %14, %cst_12 {dimension_numbers = #tpu.dot_dimension_numbers<[1], [0], [0], [1], [0, 0, 1, 1], [], []>} : vector<8x128xf32>, vector<128x128xf32>, vector<8x128xf32> -> vector<8x128xf32>
    %17 = vector.broadcast %15 : vector<1x128xf32> to vector<8x128xf32>
    %18 = arith.addf %16, %17 : vector<8x128xf32>
    %cst_13 = arith.constant 5.000000e-01 : f32
    %19 = vector.broadcast %cst_13 : f32 to vector<8x128xf32>
    %20 = arith.mulf %19, %18 : vector<8x128xf32>
    %cst_14 = arith.constant 0.707106769 : f32
    %21 = vector.broadcast %cst_14 : f32 to vector<8x128xf32>
    %22 = arith.mulf %18, %21 : vector<8x128xf32>
    %23 = math.erf %22 : vector<8x128xf32>
    %cst_15 = arith.constant 1.000000e+00 : f32
    %24 = vector.broadcast %cst_15 : f32 to vector<8x128xf32>
    %25 = arith.addf %24, %23 : vector<8x128xf32>
    %26 = arith.mulf %20, %25 : vector<8x128xf32>
    %c0_16 = arith.constant 0 : index
    %c0_17 = arith.constant 0 : index
    %27 = vector.load %arg5[%c0_16, %c0_17] : memref<128x128xf32, #tpu.memory_space<vmem>>, vector<128x128xf32>
    %c0_18 = arith.constant 0 : index
    %c0_19 = arith.constant 0 : index
    %28 = vector.load %arg6[%c0_18, %c0_19] : memref<1x128xf32, #tpu.memory_space<vmem>>, vector<1x128xf32>
    %cst_20 = arith.constant dense<0.000000e+00> : vector<8x128xf32>
    %29 = tpu.matmul %26, %27, %cst_20 {dimension_numbers = #tpu.dot_dimension_numbers<[1], [0], [0], [1], [0, 0, 1, 1], [], []>} : vector<8x128xf32>, vector<128x128xf32>, vector<8x128xf32> -> vector<8x128xf32>
    %30 = vector.broadcast %28 : vector<1x128xf32> to vector<8x128xf32>
    %31 = arith.addf %29, %30 : vector<8x128xf32>
    %c0_21 = arith.constant 0 : index
    %c0_22 = arith.constant 0 : index
    %32 = vector.load %arg7[%c0_21, %c0_22] : memref<8x128xf32, #tpu.memory_space<vmem>>, vector<8x128xf32>
    tpu.vector_store %arg7[%c0_21, %c0_22], %31 {strides = array<i32>} : memref<8x128xf32, #tpu.memory_space<vmem>>, vector<8x128xf32>,
    return
  }
}

</mosaic_0001>

<llo_original>
// kernel: ffnn_forward.1
$region0: #{ffnn_forward.1}
  #allocation0 [shape = 'u32[]', space=smem, size = 0x4, offset = 0x4, fixed_abs, tag = 'smem constant byte address 0x4 - core index']
  #allocation1 [shape = 'u32[144,128]{1,0:T(1,128)}', space=vmem, size = 0x12000, scoped, tag = 'internal scratch']
  %s0 = inlined_call_operand.vmem [shape: f32[8,128], index: 0, kind: input, shape index: {}]
  %s1 = inlined_call_operand.vmem [shape: f32[128,128], index: 1, kind: input, shape index: {}]
  %s2 = inlined_call_operand.vmem [shape: f32[1,128], index: 2, kind: input, shape index: {}]
  %s3 = inlined_call_operand.vmem [shape: f32[128,128], index: 3, kind: input, shape index: {}]
  %s4 = inlined_call_operand.vmem [shape: f32[1,128], index: 4, kind: input, shape index: {}]
  %s5 = inlined_call_operand.vmem [shape: f32[128,128], index: 5, kind: input, shape index: {}]
  %s6 = inlined_call_operand.vmem [shape: f32[1,128], index: 6, kind: input, shape index: {}]
  %s7 = inlined_call_operand.vmem [shape: f32[8,128], index: 7, kind: output, shape index: {}]
  %s8 = sld [smem:[#allocation0]]
  $region38: #{ffnn_forward.1} parent=0
    _
  %s10 = ssub.s32 1, %s8
  %s11 = scalar_select 0, %s10, %s8
  // Predicated region
  $region2: #{ffnn_forward.1} parent=0 // pred_check
    _
  $region3: #{ffnn_forward.1} parent=0 // pred_check_branch
    %13 = sbr.rel (0) target = $region5
  $region4: #{ffnn_forward.1} parent=0 // pred_region
    _
  $region5: #{ffnn_forward.1} parent=0 // pred_fallthru
    _
  // Predicated region
  $region6: #{ffnn_forward.1} parent=0 // pred_check
    _
  $region7: #{ffnn_forward.1} parent=0 // pred_check_branch
    %15 = sbr.rel (0) target = $region9
  $region8: #{ffnn_forward.1} parent=0 // pred_region
    _
  $region9: #{ffnn_forward.1} parent=0 // pred_fallthru
    _
  // Predicated region
  $region10: #{ffnn_forward.1} parent=0 // pred_check
    _
  $region11: #{ffnn_forward.1} parent=0 // pred_check_branch
    %17 = sbr.rel (0) target = $region13
  $region12: #{ffnn_forward.1} parent=0 // pred_region
    _
  $region13: #{ffnn_forward.1} parent=0 // pred_fallthru
    _
  // Predicated region
  $region14: #{ffnn_forward.1} parent=0 // pred_check
    _
  $region15: #{ffnn_forward.1} parent=0 // pred_check_branch
    %19 = sbr.rel (0) target = $region17
  $region16: #{ffnn_forward.1} parent=0 // pred_region
    _
  $region17: #{ffnn_forward.1} parent=0 // pred_fallthru
    _
  // Predicated region
  $region18: #{ffnn_forward.1} parent=0 // pred_check
    _
  $region19: #{ffnn_forward.1} parent=0 // pred_check_branch
    %21 = sbr.rel (0) target = $region21
  $region20: #{ffnn_forward.1} parent=0 // pred_region
    _
  $region21: #{ffnn_forward.1} parent=0 // pred_fallthru
    _
  // Predicated region
  $region22: #{ffnn_forward.1} parent=0 // pred_check
    _
  $region23: #{ffnn_forward.1} parent=0 // pred_check_branch
    %23 = sbr.rel (0) target = $region25
  $region24: #{ffnn_forward.1} parent=0 // pred_region
    _
  $region25: #{ffnn_forward.1} parent=0 // pred_fallthru
    _
  // Predicated region
  $region26: #{ffnn_forward.1} parent=0 // pred_check
    _
  $region27: #{ffnn_forward.1} parent=0 // pred_check_branch
    %25 = sbr.rel (0) target = $region29
  $region28: #{ffnn_forward.1} parent=0 // pred_region
    _
  $region29: #{ffnn_forward.1} parent=0 // pred_fallthru
    _
  %v26 = vld [vmem:[%s0] sm:$0xff]
  %v27 = vld [vmem:[%s1] sm:$0xff]
  %v28 = vld [vmem:[%s1 + $0x8] sm:$0xff]
  %v29 = vld [vmem:[%s1 + $0x10] sm:$0xff]
  %v30 = vld [vmem:[%s1 + $0x18] sm:$0xff]
  %v31 = vld [vmem:[%s1 + $0x20] sm:$0xff]
  %v32 = vld [vmem:[%s1 + $0x28] sm:$0xff]
  %v33 = vld [vmem:[%s1 + $0x30] sm:$0xff]
  %v34 = vld [vmem:[%s1 + $0x38] sm:$0xff]
  %v35 = vld [vmem:[%s1 + $0x40] sm:$0xff]
  %v36 = vld [vmem:[%s1 + $0x48] sm:$0xff]
  %v37 = vld [vmem:[%s1 + $0x50] sm:$0xff]
  %v38 = vld [vmem:[%s1 + $0x58] sm:$0xff]
  %v39 = vld [vmem:[%s1 + $0x60] sm:$0xff]
  %v40 = vld [vmem:[%s1 + $0x68] sm:$0xff]
  %v41 = vld [vmem:[%s1 + $0x70] sm:$0xff]
  %v42 = vld [vmem:[%s1 + $0x78] sm:$0xff]
  %v43 = vld [vmem:[%s2] sm:$0x1]
  %v45 = vlaneseq
  %v46 = vshrl.u32 %v45, 7
  %v47 = vsub.s32 0, %v46
  %v48 = vrot.slane %v43, %v47
  %50 = vmatprep.subr.mxu0 0.0
  %51 = vmatpush1.msra.mxu0 %v27
  %52 = vmatprep.subr.mxu0 0.0
  %53 = vmatpush1.msra.mxu0 %v28
  %54 = vmatprep.subr.mxu0 0.0
  %55 = vmatpush1.msra.mxu0 %v29
  %56 = vmatprep.subr.mxu0 0.0
  %57 = vmatpush1.msra.mxu0 %v30
  %58 = vmatprep.subr.mxu0 0.0
  %59 = vmatpush1.msra.mxu0 %v31
  %60 = vmatprep.subr.mxu0 0.0
  %61 = vmatpush1.msra.mxu0 %v32
  %62 = vmatprep.subr.mxu0 0.0
  %63 = vmatpush1.msra.mxu0 %v33
  %64 = vmatprep.subr.mxu0 0.0
  %65 = vmatpush1.msra.mxu0 %v34
  %66 = vmatprep.subr.mxu0 0.0
  %67 = vmatpush1.msra.mxu0 %v35
  %68 = vmatprep.subr.mxu0 0.0
  %69 = vmatpush1.msra.mxu0 %v36
  %70 = vmatprep.subr.mxu0 0.0
  %71 = vmatpush1.msra.mxu0 %v37
  %72 = vmatprep.subr.mxu0 0.0
  %73 = vmatpush1.msra.mxu0 %v38
  %74 = vmatprep.subr.mxu0 0.0
  %75 = vmatpush1.msra.mxu0 %v39
  %76 = vmatprep.subr.mxu0 0.0
  %77 = vmatpush1.msra.mxu0 %v40
  %78 = vmatprep.subr.mxu0 0.0
  %79 = vmatpush1.msra.mxu0 %v41
  %80 = vmatprep.subr.mxu0 0.0
  %81 = vmatpush1.msra.mxu0 %v42
  %82 = vmatprep.subr.mxu0 0.0
  %83 = vmatpush1.msra.mxu0 0.0
  %84 = vmatprep.subr.mxu0 0.0
  %85 = vmatpush1.msra.mxu0 0.0
  %86 = vmatprep.subr.mxu0 0.0
  %87 = vmatpush1.msra.mxu0 0.0
  %88 = vmatprep.subr.mxu0 0.0
  %89 = vmatpush1.msra.mxu0 0.0
  %90 = vmatprep.subr.mxu0 0.0
  %91 = vmatpush1.msra.mxu0 0.0
  %92 = vmatprep.subr.mxu0 0.0
  %93 = vmatpush1.msra.mxu0 0.0
  %94 = vmatprep.subr.mxu0 0.0
  %95 = vmatpush1.msra.mxu0 0.0
  %96 = vmatprep.subr.mxu0 0.0
  %97 = vmatpush1.msra.mxu0 0.0
  %98 = vmatprep.subr.mxu0 0.0
  %99 = vmatpush1.msra.mxu0 0.0
  %100 = vmatprep.subr.mxu0 0.0
  %101 = vmatpush1.msra.mxu0 0.0
  %102 = vmatprep.subr.mxu0 0.0
  %103 = vmatpush1.msra.mxu0 0.0
  %104 = vmatprep.subr.mxu0 0.0
  %105 = vmatpush1.msra.mxu0 0.0
  %106 = vmatprep.subr.mxu0 0.0
  %107 = vmatpush1.msra.mxu0 0.0
  %108 = vmatprep.subr.mxu0 0.0
  %109 = vmatpush1.msra.mxu0 0.0
  %110 = vmatprep.subr.mxu0 0.0
  %111 = vmatpush1.msra.mxu0 0.0
  %112 = vmatprep.subr.mxu0 0.0
  %113 = vmatpush1.msra.mxu0 0.0
  %114 = vmatprep.mubr.f32.mxu0 0.0
  %115 = vmatmul.mubr.f32.gmra.mrb[0].mxu0 %v26
  %v116 = vpop.f32.mrb[0].mxu0
  %v117 = vadd.f32 %v48, %v116
  %v118 = vpop.f32.mrb[0].mxu0
  %119 = vdwg.mxu0
  %v120 = vmul.f32 %v117, 0.5
  %v121 = vmul.f32 %v117, 0.70710677
  %v122 = verf.f32.pop %v121
  %v123 = vadd.f32 %v122, 1.0
  %v124 = vmul.f32 %v120, %v123
  %v125 = vld [vmem:[%s3] sm:$0xff]
  %v126 = vld [vmem:[%s3 + $0x8] sm:$0xff]
  %v127 = vld [vmem:[%s3 + $0x10] sm:$0xff]
  %v128 = vld [vmem:[%s3 + $0x18] sm:$0xff]
  %v129 = vld [vmem:[%s3 + $0x20] sm:$0xff]
  %v130 = vld [vmem:[%s3 + $0x28] sm:$0xff]
  %v131 = vld [vmem:[%s3 + $0x30] sm:$0xff]
  %v132 = vld [vmem:[%s3 + $0x38] sm:$0xff]
  %v133 = vld [vmem:[%s3 + $0x40] sm:$0xff]
  %v134 = vld [vmem:[%s3 + $0x48] sm:$0xff]
  %v135 = vld [vmem:[%s3 + $0x50] sm:$0xff]
  %v136 = vld [vmem:[%s3 + $0x58] sm:$0xff]
  %v137 = vld [vmem:[%s3 + $0x60] sm:$0xff]
  %v138 = vld [vmem:[%s3 + $0x68] sm:$0xff]
  %v139 = vld [vmem:[%s3 + $0x70] sm:$0xff]
  %v140 = vld [vmem:[%s3 + $0x78] sm:$0xff]
  %v141 = vld [vmem:[%s4] sm:$0x1]
  %v143 = vlaneseq
  %v144 = vshrl.u32 %v143, 7
  %v145 = vsub.s32 0, %v144
  %v146 = vrot.slane %v141, %v145
  %148 = vmatprep.subr.mxu0 0.0
  %149 = vmatpush1.msra.mxu0 %v125
  %150 = vmatprep.subr.mxu0 0.0
  %151 = vmatpush1.msra.mxu0 %v126
  %152 = vmatprep.subr.mxu0 0.0
  %153 = vmatpush1.msra.mxu0 %v127
  %154 = vmatprep.subr.mxu0 0.0
  %155 = vmatpush1.msra.mxu0 %v128
  %156 = vmatprep.subr.mxu0 0.0
  %157 = vmatpush1.msra.mxu0 %v129
  %158 = vmatprep.subr.mxu0 0.0
  %159 = vmatpush1.msra.mxu0 %v130
  %160 = vmatprep.subr.mxu0 0.0
  %161 = vmatpush1.msra.mxu0 %v131
  %162 = vmatprep.subr.mxu0 0.0
  %163 = vmatpush1.msra.mxu0 %v132
  %164 = vmatprep.subr.mxu0 0.0
  %165 = vmatpush1.msra.mxu0 %v133
  %166 = vmatprep.subr.mxu0 0.0
  %167 = vmatpush1.msra.mxu0 %v134
  %168 = vmatprep.subr.mxu0 0.0
  %169 = vmatpush1.msra.mxu0 %v135
  %170 = vmatprep.subr.mxu0 0.0
  %171 = vmatpush1.msra.mxu0 %v136
  %172 = vmatprep.subr.mxu0 0.0
  %173 = vmatpush1.msra.mxu0 %v137
  %174 = vmatprep.subr.mxu0 0.0
  %175 = vmatpush1.msra.mxu0 %v138
  %176 = vmatprep.subr.mxu0 0.0
  %177 = vmatpush1.msra.mxu0 %v139
  %178 = vmatprep.subr.mxu0 0.0
  %179 = vmatpush1.msra.mxu0 %v140
  %180 = vmatprep.subr.mxu0 0.0
  %181 = vmatpush1.msra.mxu0 0.0
  %182 = vmatprep.subr.mxu0 0.0
  %183 = vmatpush1.msra.mxu0 0.0
  %184 = vmatprep.subr.mxu0 0.0
  %185 = vmatpush1.msra.mxu0 0.0
  %186 = vmatprep.subr.mxu0 0.0
  %187 = vmatpush1.msra.mxu0 0.0
  %188 = vmatprep.subr.mxu0 0.0
  %189 = vmatpush1.msra.mxu0 0.0
  %190 = vmatprep.subr.mxu0 0.0
  %191 = vmatpush1.msra.mxu0 0.0
  %192 = vmatprep.subr.mxu0 0.0
  %193 = vmatpush1.msra.mxu0 0.0
  %194 = vmatprep.subr.mxu0 0.0
  %195 = vmatpush1.msra.mxu0 0.0
  %196 = vmatprep.subr.mxu0 0.0
  %197 = vmatpush1.msra.mxu0 0.0
  %198 = vmatprep.subr.mxu0 0.0
  %199 = vmatpush1.msra.mxu0 0.0
  %200 = vmatprep.subr.mxu0 0.0
  %201 = vmatpush1.msra.mxu0 0.0
  %202 = vmatprep.subr.mxu0 0.0
  %203 = vmatpush1.msra.mxu0 0.0
  %204 = vmatprep.subr.mxu0 0.0
  %205 = vmatpush1.msra.mxu0 0.0
  %206 = vmatprep.subr.mxu0 0.0
  %207 = vmatpush1.msra.mxu0 0.0
  %208 = vmatprep.subr.mxu0 0.0
  %209 = vmatpush1.msra.mxu0 0.0
  %210 = vmatprep.subr.mxu0 0.0
  %211 = vmatpush1.msra.mxu0 0.0
  %212 = vmatprep.mubr.f32.mxu0 0.0
  %213 = vmatmul.mubr.f32.gmra.mrb[0].mxu0 %v124
  %v214 = vpop.f32.mrb[0].mxu0
  %v215 = vadd.f32 %v146, %v214
  %v216 = vpop.f32.mrb[0].mxu0
  %217 = vdwg.mxu0
  %v218 = vmul.f32 %v215, 0.5
  %v219 = vmul.f32 %v215, 0.70710677
  %v220 = verf.f32.pop %v219
  %v221 = vadd.f32 %v220, 1.0
  %v222 = vmul.f32 %v218, %v221
  %v223 = vld [vmem:[%s5] sm:$0xff]
  %v224 = vld [vmem:[%s5 + $0x8] sm:$0xff]
  %v225 = vld [vmem:[%s5 + $0x10] sm:$0xff]
  %v226 = vld [vmem:[%s5 + $0x18] sm:$0xff]
  %v227 = vld [vmem:[%s5 + $0x20] sm:$0xff]
  %v228 = vld [vmem:[%s5 + $0x28] sm:$0xff]
  %v229 = vld [vmem:[%s5 + $0x30] sm:$0xff]
  %v230 = vld [vmem:[%s5 + $0x38] sm:$0xff]
  %v231 = vld [vmem:[%s5 + $0x40] sm:$0xff]
  %v232 = vld [vmem:[%s5 + $0x48] sm:$0xff]
  %v233 = vld [vmem:[%s5 + $0x50] sm:$0xff]
  %v234 = vld [vmem:[%s5 + $0x58] sm:$0xff]
  %v235 = vld [vmem:[%s5 + $0x60] sm:$0xff]
  %v236 = vld [vmem:[%s5 + $0x68] sm:$0xff]
  %v237 = vld [vmem:[%s5 + $0x70] sm:$0xff]
  %v238 = vld [vmem:[%s5 + $0x78] sm:$0xff]
  %v239 = vld [vmem:[%s6] sm:$0x1]
  %v241 = vlaneseq
  %v242 = vshrl.u32 %v241, 7
  %v243 = vsub.s32 0, %v242
  %v244 = vrot.slane %v239, %v243
  %246 = vmatprep.subr.mxu0 0.0
  %247 = vmatpush1.msra.mxu0 %v223
  %248 = vmatprep.subr.mxu0 0.0
  %249 = vmatpush1.msra.mxu0 %v224
  %250 = vmatprep.subr.mxu0 0.0
  %251 = vmatpush1.msra.mxu0 %v225
  %252 = vmatprep.subr.mxu0 0.0
  %253 = vmatpush1.msra.mxu0 %v226
  %254 = vmatprep.subr.mxu0 0.0
  %255 = vmatpush1.msra.mxu0 %v227
  %256 = vmatprep.subr.mxu0 0.0
  %257 = vmatpush1.msra.mxu0 %v228
  %258 = vmatprep.subr.mxu0 0.0
  %259 = vmatpush1.msra.mxu0 %v229
  %260 = vmatprep.subr.mxu0 0.0
  %261 = vmatpush1.msra.mxu0 %v230
  %262 = vmatprep.subr.mxu0 0.0
  %263 = vmatpush1.msra.mxu0 %v231
  %264 = vmatprep.subr.mxu0 0.0
  %265 = vmatpush1.msra.mxu0 %v232
  %266 = vmatprep.subr.mxu0 0.0
  %267 = vmatpush1.msra.mxu0 %v233
  %268 = vmatprep.subr.mxu0 0.0
  %269 = vmatpush1.msra.mxu0 %v234
  %270 = vmatprep.subr.mxu0 0.0
  %271 = vmatpush1.msra.mxu0 %v235
  %272 = vmatprep.subr.mxu0 0.0
  %273 = vmatpush1.msra.mxu0 %v236
  %274 = vmatprep.subr.mxu0 0.0
  %275 = vmatpush1.msra.mxu0 %v237
  %276 = vmatprep.subr.mxu0 0.0
  %277 = vmatpush1.msra.mxu0 %v238
  %278 = vmatprep.subr.mxu0 0.0
  %279 = vmatpush1.msra.mxu0 0.0
  %280 = vmatprep.subr.mxu0 0.0
  %281 = vmatpush1.msra.mxu0 0.0
  %282 = vmatprep.subr.mxu0 0.0
  %283 = vmatpush1.msra.mxu0 0.0
  %284 = vmatprep.subr.mxu0 0.0
  %285 = vmatpush1.msra.mxu0 0.0
  %286 = vmatprep.subr.mxu0 0.0
  %287 = vmatpush1.msra.mxu0 0.0
  %288 = vmatprep.subr.mxu0 0.0
  %289 = vmatpush1.msra.mxu0 0.0
  %290 = vmatprep.subr.mxu0 0.0
  %291 = vmatpush1.msra.mxu0 0.0
  %292 = vmatprep.subr.mxu0 0.0
  %293 = vmatpush1.msra.mxu0 0.0
  %294 = vmatprep.subr.mxu0 0.0
  %295 = vmatpush1.msra.mxu0 0.0
  %296 = vmatprep.subr.mxu0 0.0
  %297 = vmatpush1.msra.mxu0 0.0
  %298 = vmatprep.subr.mxu0 0.0
  %299 = vmatpush1.msra.mxu0 0.0
  %300 = vmatprep.subr.mxu0 0.0
  %301 = vmatpush1.msra.mxu0 0.0
  %302 = vmatprep.subr.mxu0 0.0
  %303 = vmatpush1.msra.mxu0 0.0
  %304 = vmatprep.subr.mxu0 0.0
  %305 = vmatpush1.msra.mxu0 0.0
  %306 = vmatprep.subr.mxu0 0.0
  %307 = vmatpush1.msra.mxu0 0.0
  %308 = vmatprep.subr.mxu0 0.0
  %309 = vmatpush1.msra.mxu0 0.0
  %310 = vmatprep.mubr.f32.mxu0 0.0
  %311 = vmatmul.mubr.f32.gmra.mrb[0].mxu0 %v222
  %v312 = vpop.f32.mrb[0].mxu0
  %v313 = vadd.f32 %v244, %v312
  %v314 = vpop.f32.mrb[0].mxu0
  %315 = vdwg.mxu0
  %316 = vst [vmem:[%s7] sm:$0xff] %v313
  // Predicated region
  $region30: #{ffnn_forward.1} parent=0 // pred_check
    _
  $region31: #{ffnn_forward.1} parent=0 // pred_check_branch
    %318 = sbr.rel (0) target = $region33
  $region32: #{ffnn_forward.1} parent=0 // pred_region
    _
  $region33: #{ffnn_forward.1} parent=0 // pred_fallthru
    _
  // Predicated region
  $region34: #{ffnn_forward.1} parent=0 // pred_check
    _
  $region35: #{ffnn_forward.1} parent=0 // pred_check_branch
    %320 = sbr.rel (0) target = $region37
  $region36: #{ffnn_forward.1} parent=0 // pred_region
    _
  $region37: #{ffnn_forward.1} parent=0 // pred_fallthru
    _

</llo_original>
